<compile_context>
chip_gen: v5e
topology: v5e:2x2
jax: 0.10.0
libtpu: 0.0.40
codegen_flags: <defaults>
</compile_context>

<pallas_src>
import numpy as np
import jax
import jax.numpy as jnp
from jax.experimental import pallas as pl
from jax.experimental.pallas import tpu as pltpu


# ----------------------------------------------------------------------------
# Kernel 1: 3x3 conv (stride 1, pad 1, no bias) + folded BN + ReLU.
#   grid = (B, H // TILE_H); the full padded image for batch b stays resident in
#   VMEM across the row tiles (its block index only depends on b), each grid step
#   builds a (TILE_H*W, 9*Cin) im2col patch in bf16 and does ONE deep-K matmul.
# TODO(synk): for production-size H*W the resident full padded image should be
#   replaced by halo-blocked input tiles fetched with manual DMA.
# ----------------------------------------------------------------------------
def conv_bn_relu_kernel(xpad_ref, w_ref, scale_ref, bias_ref, o_ref):
    TH, W, Cout = o_ref.shape[1], o_ref.shape[2], o_ref.shape[3]
    Cin = xpad_ref.shape[3]
    t = pl.program_id(1)
    row0 = pl.multiple_of(t * TH, TH)
    # (TH+2, W+2, Cin) band of the padded image needed by this output row tile.
    band = xpad_ref[0, pl.ds(row0, TH + 2), :, :]

    # im2col: 9 shifted views concatenated along the contraction dim -> one matmul.
    cols = []
    for dy in range(3):
        for dx in range(3):
            cols.append(band[dy:dy + TH, dx:dx + W, :].reshape(TH * W, Cin))
    patch = jnp.concatenate(cols, axis=1).astype(jnp.bfloat16)   # (TH*W, 9*Cin)

    acc = jnp.dot(patch, w_ref[...], preferred_element_type=jnp.float32)  # f32 acc
    y = jnp.maximum(acc * scale_ref[...] + bias_ref[...], 0.0)   # BN + ReLU in f32
    o_ref[0] = y.reshape(TH, W, Cout).astype(o_ref.dtype)


def conv_bn_relu_pallas(x, w_r, scale, bias, *, out_dtype, tile_h):
    """x: (B,H,W,Cin) bf16; w_r: (9*Cin,Cout) bf16; scale/bias: (1,Cout) f32."""
    B, H, W, Cin = x.shape
    K9, Cout = w_r.shape
    assert H % tile_h == 0
    # TODO(synk): the 1-pixel halo pad is still a wrapper-side XLA op; folding it
    # into the kernel needs either masked edge handling or halo DMA.
    xpad = jnp.pad(x, ((0, 0), (1, 1), (1, 1), (0, 0)))
    return pl.pallas_call(
        conv_bn_relu_kernel,
        out_shape=jax.ShapeDtypeStruct((B, H, W, Cout), out_dtype),
        grid=(B, H // tile_h),
        in_specs=[
            pl.BlockSpec((1, H + 2, W + 2, Cin), lambda b, t: (b, 0, 0, 0)),
            pl.BlockSpec((K9, Cout), lambda b, t: (0, 0)),
            pl.BlockSpec((1, Cout), lambda b, t: (0, 0)),
            pl.BlockSpec((1, Cout), lambda b, t: (0, 0)),
        ],
        out_specs=pl.BlockSpec((1, tile_h, W, Cout), lambda b, t: (b, t, 0, 0)),
        compiler_params=pltpu.CompilerParams(
            dimension_semantics=("parallel", "parallel"),
            vmem_limit_bytes=32 * 1024 * 1024),
    )(xpad, w_r, scale, bias)


# ----------------------------------------------------------------------------
# Kernel 2: Center-guided channel attention -> only the (B, 1, C) attention vector.
#   Multi-scale center pooling is done with incremental ring sums (regions are
#   nested, so each new scale only adds its 1-pixel-thick ring), then the shared
#   MLP, mean over scales, sigmoid.
# ----------------------------------------------------------------------------
def channel_attn_kernel(y_ref, w1_ref, b1_ref, w2_ref, b2_ref, att_ref):
    x = y_ref[0]                                          # (H, W, C) f32
    H, W, C = x.shape
    m = min(H, W)

    # Static (Python) region bounds, identical to the PyTorch multi_scale_pooling.
    bounds = []
    for s in range(1, m + 1, 2):
        if s == m:
            bounds.append((0, H, 0, W))
        else:
            ch, cw = H // 2, W // 2
            hs = s // 2
            bounds.append((max(0, ch - hs), min(H, ch + hs + 1),
                           max(0, cw - hs), min(W, cw + hs + 1)))

    feats = []
    sh, eh, sw, ew = bounds[0]
    cur = jnp.sum(x[sh:eh, sw:ew, :], axis=(0, 1)).reshape(1, C)      # running SUM
    feats.append(cur * (1.0 / float((eh - sh) * (ew - sw))))
    prev = bounds[0]
    for (sh2, eh2, sw2, ew2) in bounds[1:]:
        sh1, eh1, sw1, ew1 = prev
        # add only the newly exposed ring (regions are nested).
        if sh2 < sh1:
            cur = cur + jnp.sum(x[sh2:sh1, sw2:ew2, :], axis=(0, 1)).reshape(1, C)
        if eh1 < eh2:
            cur = cur + jnp.sum(x[eh1:eh2, sw2:ew2, :], axis=(0, 1)).reshape(1, C)
        if sw2 < sw1:
            cur = cur + jnp.sum(x[sh1:eh1, sw2:sw1, :], axis=(0, 1)).reshape(1, C)
        if ew1 < ew2:
            cur = cur + jnp.sum(x[sh1:eh1, ew1:ew2, :], axis=(0, 1)).reshape(1, C)
        feats.append(cur * (1.0 / float((eh2 - sh2) * (ew2 - sw2))))
        prev = (sh2, eh2, sw2, ew2)

    f = jnp.concatenate(feats, axis=0)                    # (S, C)
    h = jnp.maximum(
        jnp.dot(f, w1_ref[...], preferred_element_type=jnp.float32) + b1_ref[...],
        0.0)
    mlp = jnp.dot(h, w2_ref[...], preferred_element_type=jnp.float32) + b2_ref[...]
    att = jax.nn.sigmoid(jnp.mean(mlp, axis=0, keepdims=True))        # (1, C)
    att_ref[0] = att


def channel_attention_pallas(y, w1, b1, w2, b2):
    B, H, W, C = y.shape
    Ch = w1.shape[1]
    return pl.pallas_call(
        channel_attn_kernel,
        out_shape=jax.ShapeDtypeStruct((B, 1, C), jnp.float32),
        grid=(B,),
        in_specs=[
            pl.BlockSpec((1, H, W, C), lambda b: (b, 0, 0, 0)),
            pl.BlockSpec((C, Ch), lambda b: (0, 0)),
            pl.BlockSpec((1, Ch), lambda b: (0, 0)),
            pl.BlockSpec((Ch, C), lambda b: (0, 0)),
            pl.BlockSpec((1, C), lambda b: (0, 0)),
        ],
        out_specs=pl.BlockSpec((1, 1, C), lambda b: (b, 0, 0)),
        compiler_params=pltpu.CompilerParams(
            dimension_semantics=("parallel",),
            vmem_limit_bytes=32 * 1024 * 1024),
    )(y, w1, b1, w2, b2)


# ----------------------------------------------------------------------------
# Kernel 3 (fused): channel-attention apply + center-guided spatial attention +
#   residual add, fully lane-dense on a (B, H, W*C) view.
#   att_tiled / wc_tiled are per-batch (1, W*C) vectors (channel values repeated W
#   times) prepared in the wrapper; the per-pixel sum over channels is done with a
#   single (W*C, W*C) block-diagonal matmul that also broadcasts the logit back to
#   every channel lane of that pixel (sigmoid rides the EUP slot).
# ----------------------------------------------------------------------------
def fused_attn_residual_kernel(y_ref, att_ref, wc_ref, bd_ref, bsa_ref,
                               res_ref, o_ref):
    y = y_ref[0]                                          # (TH, W*C) f32
    y_ca = y * att_ref[0]                                 # channel attention
    z = y_ca * wc_ref[0]                                  # per-channel top-k weight
    # kept in f32 (tiny matmul) to match the f32 reference 1x1-conv numerics.
    logits = jnp.dot(z, bd_ref[...],
                     preferred_element_type=jnp.float32) + bsa_ref[0, 0]
    sa = jax.nn.sigmoid(logits)                           # per-pixel, lane-broadcast
    o_ref[0] = y_ca * sa + res_ref[0]                     # spatial attn + residual


def fused_attn_residual_pallas(y2, att_t, wc_t, blockdiag, sa_b, res2, *, tile_h):
    B, H, WC = y2.shape
    assert H % tile_h == 0
    return pl.pallas_call(
        fused_attn_residual_kernel,
        out_shape=jax.ShapeDtypeStruct((B, H, WC), jnp.float32),
        grid=(B, H // tile_h),
        in_specs=[
            pl.BlockSpec((1, tile_h, WC), lambda b, t: (b, t, 0)),
            pl.BlockSpec((1, 1, WC), lambda b, t: (b, 0, 0)),
            pl.BlockSpec((1, 1, WC), lambda b, t: (b, 0, 0)),
            pl.BlockSpec((WC, WC), lambda b, t: (0, 0)),
            pl.BlockSpec((1, 1), lambda b, t: (0, 0)),
            pl.BlockSpec((1, tile_h, WC), lambda b, t: (b, t, 0)),
        ],
        out_specs=pl.BlockSpec((1, tile_h, WC), lambda b, t: (b, t, 0)),
        compiler_params=pltpu.CompilerParams(
            dimension_semantics=("parallel", "parallel"),
            vmem_limit_bytes=32 * 1024 * 1024),
    )(y2, att_t, wc_t, blockdiag, sa_b, res2)


# ----------------------------------------------------------------------------
# Full ResidualBlock forward (NCHW in, NCHW out).
# ----------------------------------------------------------------------------
def residual_block_forward(x_nchw, p, *, conv_tile_h=8, attn_tile_h=8):
    x = jnp.transpose(x_nchw, (0, 2, 3, 1)).astype(jnp.float32)       # NHWC f32
    B, H, W, C = x.shape
    x_bf = x.astype(jnp.bfloat16)

    # Reshape 3x3 weights to (9*Cin, Cout) for the im2col matmul, bf16 operands.
    w1r = p["w1"].reshape(9 * C, C).astype(jnp.bfloat16)
    w2r = p["w2"].reshape(9 * C, C).astype(jnp.bfloat16)

    y1 = conv_bn_relu_pallas(x_bf, w1r, p["bn1_scale"], p["bn1_bias"],
                             out_dtype=jnp.bfloat16, tile_h=conv_tile_h)
    y = conv_bn_relu_pallas(y1, w2r, p["bn2_scale"], p["bn2_bias"],
                            out_dtype=jnp.float32, tile_h=conv_tile_h)

    att = channel_attention_pallas(y, p["mlp_w1"], p["mlp_b1"],
                                   p["mlp_w2"], p["mlp_b2"])           # (B, 1, C)
    att_v = att[:, 0, :]                                               # (B, C)

    # TODO(synk): torch.topk has no clean in-kernel Pallas equivalent; the top-k
    # selection of the center-pixel features is done here with jax.lax.top_k and
    # folded (together with the k->1 1x1 conv weights) into a per-channel weight
    # vector wc_eff so the fused kernel only needs one matvec.
    center = y[:, H // 2, W // 2, :] * att_v                           # (B, C)
    _, idx = jax.lax.top_k(center, p["k"])                             # (B, k)
    onehot = jax.nn.one_hot(idx, C, dtype=jnp.float32)                 # (B, k, C)
    wc_eff = jnp.einsum("bkc,k->bc", onehot, p["sa_w"][:, 0])          # (B, C)

    # Lane-dense helpers for the (B, H, W*C) view.
    att_t = jnp.tile(att_v, (1, W)).reshape(B, 1, W * C)
    wc_t = jnp.tile(wc_eff, (1, W)).reshape(B, 1, W * C)
    blockdiag = jnp.kron(jnp.eye(W, dtype=jnp.float32),
                         jnp.ones((C, C), jnp.float32))                # (W*C, W*C)

    out2 = fused_attn_residual_pallas(
        y.reshape(B, H, W * C), att_t, wc_t, blockdiag, p["sa_b"],
        x.reshape(B, H, W * C), tile_h=attn_tile_h)

    return jnp.transpose(out2.reshape(B, H, W, C), (0, 3, 1, 2))       # NCHW


# ----------------------------------------------------------------------------
# Pure-JAX reference (same math, same parameter layout, same bf16 conv operands)
# for validation.
# ----------------------------------------------------------------------------
def ref_forward(x_nchw, p):
    x = jnp.transpose(x_nchw, (0, 2, 3, 1)).astype(jnp.float32)
    B, H, W, C = x.shape

    def cbr(z, w, scale, bias, out_dtype):
        y = jax.lax.conv_general_dilated(
            z.astype(jnp.bfloat16), w.astype(jnp.bfloat16),
            window_strides=(1, 1), padding="SAME",
            dimension_numbers=("NHWC", "HWIO", "NHWC"),
            preferred_element_type=jnp.float32)
        return jnp.maximum(y * scale + bias, 0.0).astype(out_dtype)

    y1 = cbr(x, p["w1"], p["bn1_scale"], p["bn1_bias"], jnp.bfloat16)
    y = cbr(y1, p["w2"], p["bn2_scale"], p["bn2_bias"], jnp.float32)

    m = min(H, W)
    feats = []
    for s in range(1, m + 1, 2):
        if s == m:
            region = y
        else:
            ch, cw = H // 2, W // 2
            hs = s // 2
            region = y[:, max(0, ch - hs):min(H, ch + hs + 1),
                          max(0, cw - hs):min(W, cw + hs + 1), :]
        feats.append(jnp.mean(region, axis=(1, 2)))
    f = jnp.stack(feats, axis=1)                                       # (B, S, C)
    h = jnp.maximum(f @ p["mlp_w1"] + p["mlp_b1"][0], 0.0)
    mlp = h @ p["mlp_w2"] + p["mlp_b2"][0]
    att = jax.nn.sigmoid(jnp.mean(mlp, axis=1))                        # (B, C)
    y_ca = y * att[:, None, None, :]

    center = y_ca[:, H // 2, W // 2, :]
    _, idx = jax.lax.top_k(center, p["k"])
    g = jnp.take_along_axis(y_ca.reshape(B, H * W, C), idx[:, None, :], axis=2)
    logits = g @ p["sa_w"] + p["sa_b"][0, 0]
    sa = jax.nn.sigmoid(logits).reshape(B, H, W, 1)
    out = y_ca * sa + x
    return jnp.transpose(out, (0, 3, 1, 2))


# ----------------------------------------------------------------------------
# Deterministic parameter init.
# ----------------------------------------------------------------------------
def init_params(C, reduction_ratio, k_top, key):
    ks = jax.random.split(key, 12)
    hidden = C // reduction_ratio
    eps = 1e-5
    g1 = 1.0 + 0.1 * jax.random.normal(ks[2], (1, C), jnp.float32)
    b1 = 0.05 * jax.random.normal(ks[3], (1, C), jnp.float32)
    g2 = 1.0 + 0.1 * jax.random.normal(ks[4], (1, C), jnp.float32)
    b2 = 0.05 * jax.random.normal(ks[5], (1, C), jnp.float32)
    return {
        "w1": 0.05 * jax.random.normal(ks[0], (3, 3, C, C), jnp.float32),
        "w2": 0.05 * jax.random.normal(ks[1], (3, 3, C, C), jnp.float32),
        "bn1_scale": g1 / jnp.sqrt(1.0 + eps), "bn1_bias": b1,
        "bn2_scale": g2 / jnp.sqrt(1.0 + eps), "bn2_bias": b2,
        "mlp_w1": 0.2 * jax.random.normal(ks[6], (C, hidden), jnp.float32),
        "mlp_b1": 0.05 * jax.random.normal(ks[7], (1, hidden), jnp.float32),
        "mlp_w2": 0.2 * jax.random.normal(ks[8], (hidden, C), jnp.float32),
        "mlp_b2": 0.05 * jax.random.normal(ks[9], (1, C), jnp.float32),
        "sa_w": 0.2 * jax.random.normal(ks[10], (k_top, 1), jnp.float32),
        "sa_b": 0.05 * jax.random.normal(ks[11], (1, 1), jnp.float32),
        "k": k_top,
    }


if __name__ == "__main__":
    # Small shapes: B=2, C=16 (>= k=10, in==out channels so the residual add is
    # valid), H=W=16, reduction_ratio=4 so the MLP hidden size is 4.
    B, C, H, W = 2, 16, 16, 16
    key = jax.random.PRNGKey(0)
    kx, kp = jax.random.split(key)
    x = jax.random.normal(kx, (B, C, H, W), dtype=jnp.float32)
    params = init_params(C, reduction_ratio=4, k_top=10, key=kp)

    out = residual_block_forward(x, params)
    out = jax.block_until_ready(out)

    ref = ref_forward(x, params)
    np.testing.assert_allclose(np.asarray(out), np.asarray(ref),
                               atol=2e-3, rtol=2e-3)
    print("KERNEL_OK")
</pallas_src>

<mosaic_0001>
module attributes {stable_mosaic.version = 11 : i64} {
  func.func @conv_bn_relu_kernel(%arg0: i32, %arg1: i32, %arg2: memref<1x18x18x16xbf16, #tpu.memory_space<vmem>>, %arg3: memref<144x16xbf16, #tpu.memory_space<vmem>>, %arg4: memref<1x16xf32, #tpu.memory_space<vmem>>, %arg5: memref<1x16xf32, #tpu.memory_space<vmem>>, %arg6: memref<1x8x16x16xbf16, #tpu.memory_space<vmem>>) attributes {dimension_semantics = [#tpu.dimension_semantics<parallel>, #tpu.dimension_semantics<parallel>], iteration_bounds = array<i64: 2, 2>, scalar_prefetch = 0 : i64, scratch_operands = 0 : i64, tpu.core_type = #tpu.core_type<tc>, window_params = [{transform_indices = @transform_0, window_bounds = array<i64: 1, 18, 18, 16>}, {pipeline_mode = #tpu.pipeline_mode<synchronous>, transform_indices = @transform_1, window_bounds = array<i64: 144, 16>}, {pipeline_mode = #tpu.pipeline_mode<synchronous>, transform_indices = @transform_2, window_bounds = array<i64: 1, 16>}, {pipeline_mode = #tpu.pipeline_mode<synchronous>, transform_indices = @transform_3, window_bounds = array<i64: 1, 16>}, {transform_indices = @transform_4, window_bounds = array<i64: 1, 8, 16, 16>}]} {
    %c8_i32 = arith.constant 8 : i32
    %0 = arith.muli %arg1, %c8_i32 : i32
    %1 = tpu.assume_multiple %0, 8 : i32
    %c0 = arith.constant 0 : index
    %2 = arith.index_cast %1 : i32 to index
    %c0_0 = arith.constant 0 : index
    %c0_1 = arith.constant 0 : index
    %3 = vector.load %arg2[%c0, %2, %c0_0, %c0_1] : memref<1x18x18x16xbf16, #tpu.memory_space<vmem>>, vector<1x10x18x16xbf16>
    %4 = vector.shape_cast %3 : vector<1x10x18x16xbf16> to vector<10x18x16xbf16>
    %5 = vector.extract_strided_slice %4 {offsets = [0, 0, 0], sizes = [8, 16, 16], strides = [1, 1, 1]} : vector<10x18x16xbf16> to vector<8x16x16xbf16>
    %6 = vector.shape_cast %5 : vector<8x16x16xbf16> to vector<128x16xbf16>
    %7 = vector.extract_strided_slice %4 {offsets = [0, 1, 0], sizes = [8, 16, 16], strides = [1, 1, 1]} : vector<10x18x16xbf16> to vector<8x16x16xbf16>
    %8 = vector.shape_cast %7 : vector<8x16x16xbf16> to vector<128x16xbf16>
    %9 = vector.extract_strided_slice %4 {offsets = [0, 2, 0], sizes = [8, 16, 16], strides = [1, 1, 1]} : vector<10x18x16xbf16> to vector<8x16x16xbf16>
    %10 = vector.shape_cast %9 : vector<8x16x16xbf16> to vector<128x16xbf16>
    %11 = vector.extract_strided_slice %4 {offsets = [1, 0, 0], sizes = [8, 16, 16], strides = [1, 1, 1]} : vector<10x18x16xbf16> to vector<8x16x16xbf16>
    %12 = vector.shape_cast %11 : vector<8x16x16xbf16> to vector<128x16xbf16>
    %13 = vector.extract_strided_slice %4 {offsets = [1, 1, 0], sizes = [8, 16, 16], strides = [1, 1, 1]} : vector<10x18x16xbf16> to vector<8x16x16xbf16>
    %14 = vector.shape_cast %13 : vector<8x16x16xbf16> to vector<128x16xbf16>
    %15 = vector.extract_strided_slice %4 {offsets = [1, 2, 0], sizes = [8, 16, 16], strides = [1, 1, 1]} : vector<10x18x16xbf16> to vector<8x16x16xbf16>
    %16 = vector.shape_cast %15 : vector<8x16x16xbf16> to vector<128x16xbf16>
    %17 = vector.extract_strided_slice %4 {offsets = [2, 0, 0], sizes = [8, 16, 16], strides = [1, 1, 1]} : vector<10x18x16xbf16> to vector<8x16x16xbf16>
    %18 = vector.shape_cast %17 : vector<8x16x16xbf16> to vector<128x16xbf16>
    %19 = vector.extract_strided_slice %4 {offsets = [2, 1, 0], sizes = [8, 16, 16], strides = [1, 1, 1]} : vector<10x18x16xbf16> to vector<8x16x16xbf16>
    %20 = vector.shape_cast %19 : vector<8x16x16xbf16> to vector<128x16xbf16>
    %21 = vector.extract_strided_slice %4 {offsets = [2, 2, 0], sizes = [8, 16, 16], strides = [1, 1, 1]} : vector<10x18x16xbf16> to vector<8x16x16xbf16>
    %22 = vector.shape_cast %21 : vector<8x16x16xbf16> to vector<128x16xbf16>
    %23 = tpu.concatenate %6, %8, %10, %12, %14, %16, %18, %20, %22 in 1 : vector<128x16xbf16>, vector<128x16xbf16>, vector<128x16xbf16>, vector<128x16xbf16>, vector<128x16xbf16>, vector<128x16xbf16>, vector<128x16xbf16>, vector<128x16xbf16>, vector<128x16xbf16> -> vector<128x144xbf16>
    %c0_2 = arith.constant 0 : index
    %c0_3 = arith.constant 0 : index
    %24 = vector.load %arg3[%c0_2, %c0_3] : memref<144x16xbf16, #tpu.memory_space<vmem>>, vector<144x16xbf16>
    %cst = arith.constant dense<0.000000e+00> : vector<128x16xf32>
    %25 = tpu.matmul %23, %24, %cst {dimension_numbers = #tpu.dot_dimension_numbers<[1], [0], [0], [1], [0, 0, 1, 1], [], []>} : vector<128x144xbf16>, vector<144x16xbf16>, vector<128x16xf32> -> vector<128x16xf32>
    %c0_4 = arith.constant 0 : index
    %c0_5 = arith.constant 0 : index
    %26 = vector.load %arg4[%c0_4, %c0_5] : memref<1x16xf32, #tpu.memory_space<vmem>>, vector<1x16xf32>
    %27 = vector.broadcast %26 : vector<1x16xf32> to vector<128x16xf32>
    %28 = arith.mulf %25, %27 : vector<128x16xf32>
    %c0_6 = arith.constant 0 : index
    %c0_7 = arith.constant 0 : index
    %29 = vector.load %arg5[%c0_6, %c0_7] : memref<1x16xf32, #tpu.memory_space<vmem>>, vector<1x16xf32>
    %30 = vector.broadcast %29 : vector<1x16xf32> to vector<128x16xf32>
    %31 = arith.addf %28, %30 : vector<128x16xf32>
    %cst_8 = arith.constant 0.000000e+00 : f32
    %32 = vector.broadcast %cst_8 : f32 to vector<128x16xf32>
    %33 = arith.maximumf %31, %32 : vector<128x16xf32>
    %34 = vector.shape_cast %33 : vector<128x16xf32> to vector<8x16x16xf32>
    %35 = arith.truncf %34 : vector<8x16x16xf32> to vector<8x16x16xbf16>
    %c0_9 = arith.constant 0 : index
    %c0_10 = arith.constant 0 : index
    %c0_11 = arith.constant 0 : index
    %c0_12 = arith.constant 0 : index
    %36 = vector.load %arg6[%c0_9, %c0_10, %c0_11, %c0_12] : memref<1x8x16x16xbf16, #tpu.memory_space<vmem>>, vector<1x8x16x16xbf16>
    %37 = vector.shape_cast %36 : vector<1x8x16x16xbf16> to vector<8x16x16xbf16>
    %38 = vector.shape_cast %35 : vector<8x16x16xbf16> to vector<1x8x16x16xbf16>
    tpu.vector_store %arg6[%c0_9, %c0_10, %c0_11, %c0_12], %38 {strides = array<i32>} : memref<1x8x16x16xbf16, #tpu.memory_space<vmem>>, vector<1x8x16x16xbf16>,
    return
  }
  func.func @transform_0(%arg0: i32, %arg1: i32) -> (i32, i32, i32, i32) {
    %c0_i32 = arith.constant 0 : i32
    %c0_i32_0 = arith.constant 0 : i32
    %c0_i32_1 = arith.constant 0 : i32
    %c0_i32_2 = arith.constant 0 : i32
    return %arg0, %c0_i32, %c0_i32_0, %c0_i32_1 : i32, i32, i32, i32
  }
  func.func @transform_1(%arg0: i32, %arg1: i32) -> (i32, i32) {
    %c0_i32 = arith.constant 0 : i32
    %c0_i32_0 = arith.constant 0 : i32
    %c0_i32_1 = arith.constant 0 : i32
    return %c0_i32, %c0_i32_0 : i32, i32
  }
  func.func @transform_2(%arg0: i32, %arg1: i32) -> (i32, i32) {
    %c0_i32 = arith.constant 0 : i32
    %c0_i32_0 = arith.constant 0 : i32
    %c0_i32_1 = arith.constant 0 : i32
    return %c0_i32, %c0_i32_0 : i32, i32
  }
  func.func @transform_3(%arg0: i32, %arg1: i32) -> (i32, i32) {
    %c0_i32 = arith.constant 0 : i32
    %c0_i32_0 = arith.constant 0 : i32
    %c0_i32_1 = arith.constant 0 : i32
    return %c0_i32, %c0_i32_0 : i32, i32
  }
  func.func @transform_4(%arg0: i32, %arg1: i32) -> (i32, i32, i32, i32) {
    %c0_i32 = arith.constant 0 : i32
    %c0_i32_0 = arith.constant 0 : i32
    %c0_i32_1 = arith.constant 0 : i32
    return %arg0, %arg1, %c0_i32, %c0_i32_0 : i32, i32, i32, i32
  }
}

</mosaic_0001>

<llo_original>
// kernel: tpu_custom_call.1
$region0: #{tpu_custom_call.1}
  #allocation0 [shape = 'u32[]', space=smem, size = 0x4, offset = 0x4, fixed_abs, tag = 'smem constant byte address 0x4 - core index']
  #allocation1 [shape = 'u32[72,128]{1,0:T(1,128)}', space=vmem, size = 0x9000, scoped, tag = 'internal scratch']
  %s0 = inlined_call_operand.vmem [shape: bf16[2,18,18,16], index: 0, kind: input, shape index: {}]
  %s1 = inlined_call_operand.vmem [shape: bf16[144,16], index: 1, kind: input, shape index: {}]
  %s2 = inlined_call_operand.vmem [shape: f32[1,16], index: 2, kind: input, shape index: {}]
  %s3 = inlined_call_operand.vmem [shape: f32[1,16], index: 3, kind: input, shape index: {}]
  %s4 = inlined_call_operand.hbm [shape: bf16[2,16,16,16], index: 4, kind: output, shape index: {}]
  %s5 = sld [smem:[#allocation0]]
  $region49: #{tpu_custom_call.1} parent=0
    _
  %s7 = ssub.s32 1, %s5
  %s8 = scalar_select 0, %s7, %s5
  $region1: #{tpu_custom_call.1} parent=0
    #allocation2 [shape = 'u8[65536]{0}', space=vmem, size = 0x10000, scoped, tag = 'output window, operand 0']
    #allocation3 [shape = 's32[2]{0}', space=sflag, size = 0x8, scoped, tag = 'scoped memory for tpu_custom_call.1']
    %9 = vsyncpa [#allocation3], 0
    %s10 = scalar_lea.sflag [#allocation3], 1
    %11 = vsyncpa %s10, 0
    loop: start=0, step=1, limit=6
    $region2: #{tpu_custom_call.1} parent=1 // loop_pre_header
      _
    $region3: #{tpu_custom_call.1} parent=1 // loop_header
      %s13 = sphi 0, %s17
      %p14 = scmp.ge.s32.totalorder %s13, 6
      %s20 = sphi 0, %s32
      %s21 = sphi 0, %s28
      %s22 = sphi 0, %s20
      %s23 = sphi 0, %s21
      %s24 = sphi 0, %s22
      %s25 = sphi 0, %s23
      %s35 = sphi 0, %s37
      %s38 = sphi 0, %s35
      %s39 = sphi 0, %s38
      %s55 = sphi 0, %s39
      %s59 = sphi 0, %s59
      %s61 = sphi 0, %s59
      %s62 = sphi 0, %s61
      %s76 = sphi 0, %s62
      %s80 = sphi 0, %s80
      %s82 = sphi 0, %s80
      %s83 = sphi 0, %s82
      %s97 = sphi 0, %s83
      %s101 = sphi 0, %s101
      %s103 = sphi 0, %s101
      %s104 = sphi 0, %s103
      %s118 = sphi 0, %s104
      %s126 = sphi 0, %s128
      %s129 = sphi 0, %s126
      %s130 = sphi 0, %s129
      %s146 = sphi 0, %s130
    $region4: #{tpu_custom_call.1} parent=1 // loop_header_branch
      %16 = sbr.rel (%p14) target = $region8
    $region5: #{tpu_custom_call.1} parent=1 // loop_body
      %s18 = ssub.s32 %s13, 1
      %s19 = ssub.s32 %s13, 2
      %s26 = sadd.s32 1, %s21
      %p27 = scmp.ge.s32.totalorder %s26, 2
      %s28 = scalar_select %p27, 0, %s26
      %s29 = sadd.s32 1, %s20
      %s30 = scalar_select %p27, %s29, %s20
      %p31 = scmp.ge.s32.totalorder %s30, 2
      %s32 = scalar_select %p31, 0, %s30
      %s33 = ssub.s32 %s20, %s32
      %p34 = scmp.eq.s32.totalorder %s33, 0
      %s36 = sadd.s32 %s35, 1
      %s37 = scalar_select %p34, %s35, %s36
      %p40 = pneg %p34
      %p41 = scmp.eq.s32.totalorder %s13, 3
      %p42 = por %p40, %p41
      %p43 = scmp.ne.s32.totalorder %s35, %s38
      %p44 = scmp.eq.s32.totalorder %s13, 0
      %p45 = por %p43, %p44
      %p46 = scmp.ne.s32.totalorder %s35, %s38
      %p47 = scmp.eq.s32.totalorder %s18, 3
      %p48 = por %p46, %p47
      %p49 = scmp.ne.s32.totalorder %s38, %s39
      %p50 = scmp.eq.s32.totalorder %s18, 0
      %p51 = por %p49, %p50
      %p52 = scmp.ne.s32.totalorder %s38, %s39
      %p53 = scmp.eq.s32.totalorder %s19, 3
      %p54 = por %p52, %p53
      %p56 = scmp.ne.s32.totalorder %s39, %s55
      %p57 = scmp.eq.s32.totalorder %s19, 0
      %p58 = por %p56, %p57
      %s60 = sadd.s32 %s59, 1
      %p63 = scmp.eq.s32.totalorder %s13, 3
      %p64 = scmp.ne.s32.totalorder %s59, %s61
      %p65 = scmp.eq.s32.totalorder %s13, 0
      %p66 = por %p64, %p65
      %p67 = scmp.ne.s32.totalorder %s59, %s61
      %p68 = scmp.eq.s32.totalorder %s18, 3
      %p69 = por %p67, %p68
      %p70 = scmp.ne.s32.totalorder %s61, %s62
      %p71 = scmp.eq.s32.totalorder %s18, 0
      %p72 = por %p70, %p71
      %p73 = scmp.ne.s32.totalorder %s61, %s62
      %p74 = scmp.eq.s32.totalorder %s19, 3
      %p75 = por %p73, %p74
      %p77 = scmp.ne.s32.totalorder %s62, %s76
      %p78 = scmp.eq.s32.totalorder %s19, 0
      %p79 = por %p77, %p78
      %s81 = sadd.s32 %s80, 1
      %p84 = scmp.eq.s32.totalorder %s13, 3
      %p85 = scmp.ne.s32.totalorder %s80, %s82
      %p86 = scmp.eq.s32.totalorder %s13, 0
      %p87 = por %p85, %p86
      %p88 = scmp.ne.s32.totalorder %s80, %s82
      %p89 = scmp.eq.s32.totalorder %s18, 3
      %p90 = por %p88, %p89
      %p91 = scmp.ne.s32.totalorder %s82, %s83
      %p92 = scmp.eq.s32.totalorder %s18, 0
      %p93 = por %p91, %p92
      %p94 = scmp.ne.s32.totalorder %s82, %s83
      %p95 = scmp.eq.s32.totalorder %s19, 3
      %p96 = por %p94, %p95
      %p98 = scmp.ne.s32.totalorder %s83, %s97
      %p99 = scmp.eq.s32.totalorder %s19, 0
      %p100 = por %p98, %p99
      %s102 = sadd.s32 %s101, 1
      %p105 = scmp.eq.s32.totalorder %s13, 3
      %p106 = scmp.ne.s32.totalorder %s101, %s103
      %p107 = scmp.eq.s32.totalorder %s13, 0
      %p108 = por %p106, %p107
      %p109 = scmp.ne.s32.totalorder %s101, %s103
      %p110 = scmp.eq.s32.totalorder %s18, 3
      %p111 = por %p109, %p110
      %p112 = scmp.ne.s32.totalorder %s103, %s104
      %p113 = scmp.eq.s32.totalorder %s18, 0
      %p114 = por %p112, %p113
      %p115 = scmp.ne.s32.totalorder %s103, %s104
      %p116 = scmp.eq.s32.totalorder %s19, 3
      %p117 = por %p115, %p116
      %p119 = scmp.ne.s32.totalorder %s104, %s118
      %p120 = scmp.eq.s32.totalorder %s19, 0
      %p121 = por %p119, %p120
      %s122 = ssub.s32 %s20, %s32
      %s123 = ssub.s32 %s21, %s28
      %s124 = sor.u32 %s122, %s123
      %p125 = scmp.eq.s32.totalorder %s124, 0
      %s127 = sadd.s32 %s126, 1
      %s128 = scalar_select %p125, %s126, %s127
      %p131 = pneg %p125
      %p132 = scmp.eq.s32.totalorder %s13, 3
      %p133 = por %p131, %p132
      %p134 = scmp.ne.s32.totalorder %s126, %s129
      %p135 = scmp.eq.s32.totalorder %s13, 0
      %p136 = por %p134, %p135
      %p137 = scmp.ne.s32.totalorder %s126, %s129
      %p138 = scmp.eq.s32.totalorder %s18, 3
      %p139 = por %p137, %p138
      %p140 = scmp.ne.s32.totalorder %s129, %s130
      %p141 = scmp.eq.s32.totalorder %s18, 0
      %p142 = por %p140, %p141
      %p143 = scmp.ne.s32.totalorder %s129, %s130
      %p144 = scmp.eq.s32.totalorder %s19, 3
      %p145 = por %p143, %p144
      %p147 = scmp.ne.s32.totalorder %s130, %s146
      %p148 = scmp.eq.s32.totalorder %s19, 0
      %p149 = por %p147, %p148
      %p150 = scmp.le.s32.totalorder 1, %s13
      %p151 = scmp.lt.s32.totalorder %s13, 5
      %p152 = pnand %p150, %p151
      %p153 = pneg %p152
      // Predicated region
      $region9: #{tpu_custom_call.1} parent=5 // pred_check
        _
      $region10: #{tpu_custom_call.1} parent=5 // pred_check_branch
        %155 = sbr.rel (%p152) target = $region12
      $region11: #{tpu_custom_call.1} parent=5 // pred_region
        %s156 = ssub.s32 %s13, 1
        // Predicated region
        $region13: #{tpu_custom_call.1} parent=11 // pred_check
          %p157 = pneg %p72
        $region14: #{tpu_custom_call.1} parent=11 // pred_check_branch
          %159 = sbr.rel (%p157) target = $region16
        $region15: #{tpu_custom_call.1} parent=11 // pred_region
          _
        $region16: #{tpu_custom_call.1} parent=11 // pred_fallthru
          _
        // Predicated region
        $region17: #{tpu_custom_call.1} parent=11 // pred_check
          %p160 = pneg %p93
        $region18: #{tpu_custom_call.1} parent=11 // pred_check_branch
          %162 = sbr.rel (%p160) target = $region20
        $region19: #{tpu_custom_call.1} parent=11 // pred_region
          _
        $region20: #{tpu_custom_call.1} parent=11 // pred_fallthru
          _
        // Predicated region
        $region21: #{tpu_custom_call.1} parent=11 // pred_check
          %p163 = pneg %p114
        $region22: #{tpu_custom_call.1} parent=11 // pred_check_branch
          %165 = sbr.rel (%p163) target = $region24
        $region23: #{tpu_custom_call.1} parent=11 // pred_region
          _
        $region24: #{tpu_custom_call.1} parent=11 // pred_fallthru
          _
      $region12: #{tpu_custom_call.1} parent=5 // pred_fallthru
        _
      %p166 = scmp.lt.s32.totalorder %s13, 4
      // Predicated region
      $region25: #{tpu_custom_call.1} parent=5 // pred_check
        %p167 = pneg %p166
      $region26: #{tpu_custom_call.1} parent=5 // pred_check_branch
        %169 = sbr.rel (%p167) target = $region28
      $region27: #{tpu_custom_call.1} parent=5 // pred_region
        // Predicated region
        $region29: #{tpu_custom_call.1} parent=27 // pred_check
          %p170 = pneg %p45
        $region30: #{tpu_custom_call.1} parent=27 // pred_check_branch
          %172 = sbr.rel (%p170) target = $region32
        $region31: #{tpu_custom_call.1} parent=27 // pred_region
          %p173 = scmp.lt.s32.totalorder %s20, 1
          %s174 = scalar_select %p173, %s20, 1
          %s175 = smul.addr %s174, 54
          %s176 = smul.addr %s175, 4
          %s177 = scalar_lea.vmem %s0, %s176
        $region32: #{tpu_custom_call.1} parent=27 // pred_fallthru
          _
      $region28: #{tpu_custom_call.1} parent=5 // pred_fallthru
        _
      %p178 = scmp.le.s32.totalorder 1, %s13
      %p179 = scmp.lt.s32.totalorder %s13, 5
      %p180 = pnand %p178, %p179
      %p181 = pneg %p180
      // Predicated region
      $region33: #{tpu_custom_call.1} parent=5 // pred_check
        _
      $region34: #{tpu_custom_call.1} parent=5 // pred_check_branch
        %183 = sbr.rel (%p180) target = $region36
      $region35: #{tpu_custom_call.1} parent=5 // pred_region
        %s184 = ssub.s32 %s13, 1
        %p185 = scmp.lt.s32.totalorder %s22, 1
        %s186 = scalar_select %p185, %s22, 1
        %s187 = smul.addr %s186, 54
        %s188 = smul.addr %s187, 4
        %s189 = scalar_lea.vmem %s0, %s188
        %p190 = pneg %p51
        %p191 = pneg %p48
        %p192 = pneg %p72
        %p193 = pneg %p69
        %p194 = pneg %p93
        %p195 = pneg %p90
        %p196 = pneg %p114
        %p197 = pneg %p111
        %p198 = pneg %p142
        %p199 = pneg %p139
        %s200 = sand.u32 %s129, 1
        %s201 = scalar_lea.sflag [#allocation3], %s200
        %s202 = sand.u32 %s129, 1
        %s203 = smul.addr %s202, 64
        %s204 = scalar_lea.vmem [#allocation2], %s203
        %p205 = scmp.lt.s32.totalorder %s22, 1
        %s206 = scalar_select %p205, %s22, 1
        %s207 = smul.addr %s206, 54
        %s208 = smul.addr %s207, 4
        %s209 = scalar_lea.vmem %s0, %s208
        %s210 = smul.u32 8, %s23
        %s212 = smul.u32 %s23, 8
        %s213 = smul.u32 %s212, 3
        %s214 = smul.addr %s213, 4
        %s215 = scalar_lea.vmem %s209, %s214
        %v216 = vld [vmem:[%s215] sm:$0xf]
        %v217 = vld [vmem:[%s215 + $0x4] sm:$0xf]
        %v218 = vld [vmem:[%s215 + $0x8] sm:$0x1]
        %v219 = vld [vmem:[%s215 + $0xc] sm:$0xf]
        %v220 = vld [vmem:[%s215 + $0x10] sm:$0xf]
        %v221 = vld [vmem:[%s215 + $0x14] sm:$0x1]
        %v222 = vld [vmem:[%s215 + $0x18] sm:$0xf]
        %v223 = vld [vmem:[%s215 + $0x1c] sm:$0xf]
        %v224 = vld [vmem:[%s215 + $0x20] sm:$0x1]
        %v225 = vld [vmem:[%s215 + $0x24] sm:$0xf]
        %v226 = vld [vmem:[%s215 + $0x28] sm:$0xf]
        %v227 = vld [vmem:[%s215 + $0x2c] sm:$0x1]
        %v228 = vld [vmem:[%s215 + $0x30] sm:$0xf]
        %v229 = vld [vmem:[%s215 + $0x34] sm:$0xf]
        %v230 = vld [vmem:[%s215 + $0x38] sm:$0x1]
        %v231 = vld [vmem:[%s215 + $0x3c] sm:$0xf]
        %v232 = vld [vmem:[%s215 + $0x40] sm:$0xf]
        %v233 = vld [vmem:[%s215 + $0x44] sm:$0x1]
        %v234 = vld [vmem:[%s215 + $0x48] sm:$0xf]
        %v235 = vld [vmem:[%s215 + $0x4c] sm:$0xf]
        %v236 = vld [vmem:[%s215 + $0x50] sm:$0x1]
        %v237 = vld [vmem:[%s215 + $0x54] sm:$0xf]
        %v238 = vld [vmem:[%s215 + $0x58] sm:$0xf]
        %v239 = vld [vmem:[%s215 + $0x5c] sm:$0x1]
        %v240 = vld [vmem:[%s215 + $0x60] sm:$0xf]
        %v241 = vld [vmem:[%s215 + $0x64] sm:$0xf]
        %v242 = vld [vmem:[%s215 + $0x68] sm:$0x1]
        %v243 = vld [vmem:[%s215 + $0x6c] sm:$0xf]
        %v244 = vld [vmem:[%s215 + $0x70] sm:$0xf]
        %v245 = vld [vmem:[%s215 + $0x74] sm:$0x1]
        %vm246 = vsmask.f32 3328
        %vm247 = vsmask.f32 7440
        %vm248 = vmor %vm246, %vm247
        %v250 = vshrl.u32 %v216, 16
        %v252 = vrot.slane %v250, 4
        %v253 = vshll.u32 %v216, 16
        %v255 = vrot.slane %v253, 5
        %v256 = vor.u32 %v252, %v255
        %v257 = vrot.slane %v256, 4
        %v259 = vshll.u32 %v217, 16
        %v261 = vrot.slane %v259, 5
        %v262 = vsel %vm248, %v257, %v261
        %v263 = vshrl.u32 %v217, 16
        %v265 = vrot.slane %v263, 4
        %v266 = vor.u32 %v265, %v261
        %v267 = vrot.slane %v266, 4
        %v269 = vshll.u32 %v218, 16
        %v271 = vrot.slane %v269, 5
        %v272 = vsel %vm248, %v267, %v271
        %v274 = vshrl.u32 %v219, 16
        %v276 = vrot.slane %v274, 4
        %v277 = vshll.u32 %v219, 16
        %v279 = vrot.slane %v277, 5
        %v280 = vor.u32 %v276, %v279
        %v281 = vrot.slane %v280, 4
        %v283 = vshll.u32 %v220, 16
        %v285 = vrot.slane %v283, 5
        %v286 = vsel %vm248, %v281, %v285
        %v287 = vshrl.u32 %v220, 16
        %v289 = vrot.slane %v287, 4
        %v290 = vor.u32 %v289, %v285
        %v291 = vrot.slane %v290, 4
        %v293 = vshll.u32 %v221, 16
        %v295 = vrot.slane %v293, 5
        %v296 = vsel %vm248, %v291, %v295
        %v298 = vshrl.u32 %v222, 16
        %v300 = vrot.slane %v298, 4
        %v301 = vshll.u32 %v222, 16
        %v303 = vrot.slane %v301, 5
        %v304 = vor.u32 %v300, %v303
        %v305 = vrot.slane %v304, 4
        %v307 = vshll.u32 %v223, 16
        %v309 = vrot.slane %v307, 5
        %v310 = vsel %vm248, %v305, %v309
        %v311 = vshrl.u32 %v223, 16
        %v313 = vrot.slane %v311, 4
        %v314 = vor.u32 %v313, %v309
        %v315 = vrot.slane %v314, 4
        %v317 = vshll.u32 %v224, 16
        %v319 = vrot.slane %v317, 5
        %v320 = vsel %vm248, %v315, %v319
        %v322 = vshrl.u32 %v225, 16
        %v324 = vrot.slane %v322, 4
        %v325 = vshll.u32 %v225, 16
        %v327 = vrot.slane %v325, 5
        %v328 = vor.u32 %v324, %v327
        %v329 = vrot.slane %v328, 4
        %v331 = vshll.u32 %v226, 16
        %v333 = vrot.slane %v331, 5
        %v334 = vsel %vm248, %v329, %v333
        %v335 = vshrl.u32 %v226, 16
        %v337 = vrot.slane %v335, 4
        %v338 = vor.u32 %v337, %v333
        %v339 = vrot.slane %v338, 4
        %v341 = vshll.u32 %v227, 16
        %v343 = vrot.slane %v341, 5
        %v344 = vsel %vm248, %v339, %v343
        %v346 = vshrl.u32 %v228, 16
        %v348 = vrot.slane %v346, 4
        %v349 = vshll.u32 %v228, 16
        %v351 = vrot.slane %v349, 5
        %v352 = vor.u32 %v348, %v351
        %v353 = vrot.slane %v352, 4
        %v355 = vshll.u32 %v229, 16
        %v357 = vrot.slane %v355, 5
        %v358 = vsel %vm248, %v353, %v357
        %v359 = vshrl.u32 %v229, 16
        %v361 = vrot.slane %v359, 4
        %v362 = vor.u32 %v361, %v357
        %v363 = vrot.slane %v362, 4
        %v365 = vshll.u32 %v230, 16
        %v367 = vrot.slane %v365, 5
        %v368 = vsel %vm248, %v363, %v367
        %v370 = vshrl.u32 %v231, 16
        %v372 = vrot.slane %v370, 4
        %v373 = vshll.u32 %v231, 16
        %v375 = vrot.slane %v373, 5
        %v376 = vor.u32 %v372, %v375
        %v377 = vrot.slane %v376, 4
        %v379 = vshll.u32 %v232, 16
        %v381 = vrot.slane %v379, 5
        %v382 = vsel %vm248, %v377, %v381
        %v383 = vshrl.u32 %v232, 16
        %v385 = vrot.slane %v383, 4
        %v386 = vor.u32 %v385, %v381
        %v387 = vrot.slane %v386, 4
        %v389 = vshll.u32 %v233, 16
        %v391 = vrot.slane %v389, 5
        %v392 = vsel %vm248, %v387, %v391
        %v394 = vshrl.u32 %v234, 16
        %v396 = vrot.slane %v394, 4
        %v397 = vshll.u32 %v234, 16
        %v399 = vrot.slane %v397, 5
        %v400 = vor.u32 %v396, %v399
        %v401 = vrot.slane %v400, 4
        %v403 = vshll.u32 %v235, 16
        %v405 = vrot.slane %v403, 5
        %v406 = vsel %vm248, %v401, %v405
        %v407 = vshrl.u32 %v235, 16
        %v409 = vrot.slane %v407, 4
        %v410 = vor.u32 %v409, %v405
        %v411 = vrot.slane %v410, 4
        %v413 = vshll.u32 %v236, 16
        %v415 = vrot.slane %v413, 5
        %v416 = vsel %vm248, %v411, %v415
        %v418 = vshrl.u32 %v237, 16
        %v420 = vrot.slane %v418, 4
        %v421 = vshll.u32 %v237, 16
        %v423 = vrot.slane %v421, 5
        %v424 = vor.u32 %v420, %v423
        %v425 = vrot.slane %v424, 4
        %v427 = vshll.u32 %v238, 16
        %v429 = vrot.slane %v427, 5
        %v430 = vsel %vm248, %v425, %v429
        %v431 = vshrl.u32 %v238, 16
        %v433 = vrot.slane %v431, 4
        %v434 = vor.u32 %v433, %v429
        %v435 = vrot.slane %v434, 4
        %v437 = vshll.u32 %v239, 16
        %v439 = vrot.slane %v437, 5
        %v440 = vsel %vm248, %v435, %v439
        %vm465 = vcmask 1042432
        %vm466 = vcmask 1046532
        %vm467 = vmor %vm465, %vm466
        %v468 = vrot.slane %v216, 5
        %v469 = vrot.slane %v468, 4
        %v470 = vrot.slane %v217, 5
        %v471 = vsel %vm467, %v469, %v470
        %v472 = vrot.slane %v470, 4
        %v473 = vrot.slane %v218, 5
        %v474 = vsel %vm467, %v472, %v473
        %v475 = vrot.slane %v219, 5
        %v476 = vrot.slane %v475, 4
        %v477 = vrot.slane %v220, 5
        %v478 = vsel %vm467, %v476, %v477
        %v479 = vrot.slane %v477, 4
        %v480 = vrot.slane %v221, 5
        %v481 = vsel %vm467, %v479, %v480
        %v482 = vrot.slane %v222, 5
        %v483 = vrot.slane %v482, 4
        %v484 = vrot.slane %v223, 5
        %v485 = vsel %vm467, %v483, %v484
        %v486 = vrot.slane %v484, 4
        %v487 = vrot.slane %v224, 5
        %v488 = vsel %vm467, %v486, %v487
        %v489 = vrot.slane %v225, 5
        %v490 = vrot.slane %v489, 4
        %v491 = vrot.slane %v226, 5
        %v492 = vsel %vm467, %v490, %v491
        %v493 = vrot.slane %v491, 4
        %v494 = vrot.slane %v227, 5
        %v495 = vsel %vm467, %v493, %v494
        %v496 = vrot.slane %v228, 5
        %v497 = vrot.slane %v496, 4
        %v498 = vrot.slane %v229, 5
        %v499 = vsel %vm467, %v497, %v498
        %v500 = vrot.slane %v498, 4
        %v501 = vrot.slane %v230, 5
        %v502 = vsel %vm467, %v500, %v501
        %v503 = vrot.slane %v231, 5
        %v504 = vrot.slane %v503, 4
        %v505 = vrot.slane %v232, 5
        %v506 = vsel %vm467, %v504, %v505
        %v507 = vrot.slane %v505, 4
        %v508 = vrot.slane %v233, 5
        %v509 = vsel %vm467, %v507, %v508
        %v510 = vrot.slane %v234, 5
        %v511 = vrot.slane %v510, 4
        %v512 = vrot.slane %v235, 5
        %v513 = vsel %vm467, %v511, %v512
        %v514 = vrot.slane %v512, 4
        %v515 = vrot.slane %v236, 5
        %v516 = vsel %vm467, %v514, %v515
        %v517 = vrot.slane %v237, 5
        %v518 = vrot.slane %v517, 4
        %v519 = vrot.slane %v238, 5
        %v520 = vsel %vm467, %v518, %v519
        %v521 = vrot.slane %v519, 4
        %v522 = vrot.slane %v239, 5
        %v523 = vsel %vm467, %v521, %v522
        %v525 = vshrl.u32 %v240, 16
        %v527 = vrot.slane %v525, 4
        %v528 = vshll.u32 %v240, 16
        %v530 = vrot.slane %v528, 5
        %v531 = vor.u32 %v527, %v530
        %v532 = vrot.slane %v531, 4
        %v534 = vshll.u32 %v241, 16
        %v536 = vrot.slane %v534, 5
        %v537 = vsel %vm248, %v532, %v536
        %v538 = vshrl.u32 %v241, 16
        %v540 = vrot.slane %v538, 4
        %v541 = vor.u32 %v540, %v536
        %v542 = vrot.slane %v541, 4
        %v544 = vshll.u32 %v242, 16
        %v546 = vrot.slane %v544, 5
        %v547 = vsel %vm248, %v542, %v546
        %v551 = vrot.slane %v240, 5
        %v552 = vrot.slane %v551, 4
        %v553 = vrot.slane %v241, 5
        %v554 = vsel %vm467, %v552, %v553
        %v555 = vrot.slane %v553, 4
        %v556 = vrot.slane %v242, 5
        %v557 = vsel %vm467, %v555, %v556
        %v559 = vshrl.u32 %v243, 16
        %v561 = vrot.slane %v559, 4
        %v562 = vshll.u32 %v243, 16
        %v564 = vrot.slane %v562, 5
        %v565 = vor.u32 %v561, %v564
        %v566 = vrot.slane %v565, 4
        %v568 = vshll.u32 %v244, 16
        %v570 = vrot.slane %v568, 5
        %v571 = vsel %vm248, %v566, %v570
        %v572 = vshrl.u32 %v244, 16
        %v574 = vrot.slane %v572, 4
        %v575 = vor.u32 %v574, %v570
        %v576 = vrot.slane %v575, 4
        %v578 = vshll.u32 %v245, 16
        %v580 = vrot.slane %v578, 5
        %v581 = vsel %vm248, %v576, %v580
        %v585 = vrot.slane %v243, 5
        %v586 = vrot.slane %v585, 4
        %v587 = vrot.slane %v244, 5
        %v588 = vsel %vm467, %v586, %v587
        %v589 = vrot.slane %v587, 4
        %v590 = vrot.slane %v245, 5
        %v591 = vsel %vm467, %v589, %v590
        %v592 = vunpack.c.l.b16 %v216
        %v593 = vunpack.c.l.b16 %v217
        %v594 = vunpack.c.l.b16 %v219
        %v595 = vunpack.c.l.b16 %v220
        %v596 = vunpack.c.l.b16 %v222
        %v597 = vunpack.c.l.b16 %v223
        %v598 = vunpack.c.l.b16 %v225
        %v599 = vunpack.c.l.b16 %v226
        %v600 = vunpack.c.l.b16 %v228
        %v601 = vunpack.c.l.b16 %v229
        %v602 = vunpack.c.l.b16 %v231
        %v603 = vunpack.c.l.b16 %v232
        %v604 = vunpack.c.l.b16 %v234
        %v605 = vunpack.c.l.b16 %v235
        %v606 = vunpack.c.l.b16 %v237
        %v607 = vunpack.c.l.b16 %v238
        %v608 = vpack.c.b16 %v593, %v592
        %v609 = vpack.c.b16 %v595, %v594
        %v610 = vpack.c.b16 %v597, %v596
        %v611 = vpack.c.b16 %v599, %v598
        %v612 = vpack.c.b16 %v601, %v600
        %v613 = vpack.c.b16 %v603, %v602
        %v614 = vpack.c.b16 %v605, %v604
        %v615 = vpack.c.b16 %v607, %v606
        %v616 = vunpack.c.l.b16 %v262
        %v617 = vunpack.c.l.b16 %v272
        %v618 = vunpack.c.l.b16 %v286
        %v619 = vunpack.c.l.b16 %v296
        %v620 = vunpack.c.l.b16 %v310
        %v621 = vunpack.c.l.b16 %v320
        %v622 = vunpack.c.l.b16 %v334
        %v623 = vunpack.c.l.b16 %v344
        %v624 = vunpack.c.l.b16 %v358
        %v625 = vunpack.c.l.b16 %v368
        %v626 = vunpack.c.l.b16 %v382
        %v627 = vunpack.c.l.b16 %v392
        %v628 = vunpack.c.l.b16 %v406
        %v629 = vunpack.c.l.b16 %v416
        %v630 = vunpack.c.l.b16 %v430
        %v631 = vunpack.c.l.b16 %v440
        %v632 = vpack.c.b16 %v617, %v616
        %v633 = vpack.c.b16 %v619, %v618
        %v634 = vpack.c.b16 %v621, %v620
        %v635 = vpack.c.b16 %v623, %v622
        %v636 = vpack.c.b16 %v625, %v624
        %v637 = vpack.c.b16 %v627, %v626
        %v638 = vpack.c.b16 %v629, %v628
        %v639 = vpack.c.b16 %v631, %v630
        %640 = vrot.lane.b32.xlu0 %v632, 16
        %v641 = vpop.permute.xlu0 %640
        %642 = vrot.lane.b32.xlu0 %v633, 16
        %v643 = vpop.permute.xlu0 %642
        %644 = vrot.lane.b32.xlu0 %v634, 16
        %v645 = vpop.permute.xlu0 %644
        %646 = vrot.lane.b32.xlu0 %v635, 16
        %v647 = vpop.permute.xlu0 %646
        %648 = vrot.lane.b32.xlu0 %v636, 16
        %v649 = vpop.permute.xlu0 %648
        %650 = vrot.lane.b32.xlu0 %v637, 16
        %v651 = vpop.permute.xlu0 %650
        %652 = vrot.lane.b32.xlu0 %v638, 16
        %v653 = vpop.permute.xlu0 %652
        %654 = vrot.lane.b32.xlu0 %v639, 16
        %v655 = vpop.permute.xlu0 %654
        %v656 = vunpack.c.l.b16 %v471
        %v657 = vunpack.c.l.b16 %v474
        %v658 = vunpack.c.l.b16 %v478
        %v659 = vunpack.c.l.b16 %v481
        %v660 = vunpack.c.l.b16 %v485
        %v661 = vunpack.c.l.b16 %v488
        %v662 = vunpack.c.l.b16 %v492
        %v663 = vunpack.c.l.b16 %v495
        %v664 = vunpack.c.l.b16 %v499
        %v665 = vunpack.c.l.b16 %v502
        %v666 = vunpack.c.l.b16 %v506
        %v667 = vunpack.c.l.b16 %v509
        %v668 = vunpack.c.l.b16 %v513
        %v669 = vunpack.c.l.b16 %v516
        %v670 = vunpack.c.l.b16 %v520
        %v671 = vunpack.c.l.b16 %v523
        %v672 = vpack.c.b16 %v657, %v656
        %v673 = vpack.c.b16 %v659, %v658
        %v674 = vpack.c.b16 %v661, %v660
        %v675 = vpack.c.b16 %v663, %v662
        %v676 = vpack.c.b16 %v665, %v664
        %v677 = vpack.c.b16 %v667, %v666
        %v678 = vpack.c.b16 %v669, %v668
        %v679 = vpack.c.b16 %v671, %v670
        %680 = vrot.lane.b32.xlu0 %v672, 32
        %v681 = vpop.permute.xlu0 %680
        %682 = vrot.lane.b32.xlu0 %v673, 32
        %v683 = vpop.permute.xlu0 %682
        %684 = vrot.lane.b32.xlu0 %v674, 32
        %v685 = vpop.permute.xlu0 %684
        %686 = vrot.lane.b32.xlu0 %v675, 32
        %v687 = vpop.permute.xlu0 %686
        %688 = vrot.lane.b32.xlu0 %v676, 32
        %v689 = vpop.permute.xlu0 %688
        %690 = vrot.lane.b32.xlu0 %v677, 32
        %v691 = vpop.permute.xlu0 %690
        %692 = vrot.lane.b32.xlu0 %v678, 32
        %v693 = vpop.permute.xlu0 %692
        %694 = vrot.lane.b32.xlu0 %v679, 32
        %v695 = vpop.permute.xlu0 %694
        %v696 = vunpack.c.l.b16 %v240
        %v697 = vunpack.c.l.b16 %v241
        %v698 = vpack.c.b16 %v697, %v696
        %699 = vrot.lane.b32.xlu0 %v609, 48
        %v700 = vpop.permute.xlu0 %699
        %701 = vrot.lane.b32.xlu0 %v610, 48
        %v702 = vpop.permute.xlu0 %701
        %703 = vrot.lane.b32.xlu0 %v611, 48
        %v704 = vpop.permute.xlu0 %703
        %705 = vrot.lane.b32.xlu0 %v612, 48
        %v706 = vpop.permute.xlu0 %705
        %707 = vrot.lane.b32.xlu0 %v613, 48
        %v708 = vpop.permute.xlu0 %707
        %709 = vrot.lane.b32.xlu0 %v614, 48
        %v710 = vpop.permute.xlu0 %709
        %711 = vrot.lane.b32.xlu0 %v615, 48
        %v712 = vpop.permute.xlu0 %711
        %713 = vrot.lane.b32.xlu0 %v698, 48
        %v714 = vpop.permute.xlu0 %713
        %v715 = vunpack.c.l.b16 %v537
        %v716 = vunpack.c.l.b16 %v547
        %v717 = vpack.c.b16 %v716, %v715
        %718 = vrot.lane.b32.xlu0 %v633, 64
        %v719 = vpop.permute.xlu0 %718
        %720 = vrot.lane.b32.xlu0 %v634, 64
        %v721 = vpop.permute.xlu0 %720
        %722 = vrot.lane.b32.xlu0 %v635, 64
        %v723 = vpop.permute.xlu0 %722
        %724 = vrot.lane.b32.xlu0 %v636, 64
        %v725 = vpop.permute.xlu0 %724
        %726 = vrot.lane.b32.xlu0 %v637, 64
        %v727 = vpop.permute.xlu0 %726
        %728 = vrot.lane.b32.xlu0 %v638, 64
        %v729 = vpop.permute.xlu0 %728
        %730 = vrot.lane.b32.xlu0 %v639, 64
        %v731 = vpop.permute.xlu0 %730
        %732 = vrot.lane.b32.xlu0 %v717, 64
        %v733 = vpop.permute.xlu0 %732
        %v734 = vunpack.c.l.b16 %v554
        %v735 = vunpack.c.l.b16 %v557
        %v736 = vpack.c.b16 %v735, %v734
        %737 = vrot.lane.b32.xlu0 %v673, 80
        %v738 = vpop.permute.xlu0 %737
        %739 = vrot.lane.b32.xlu0 %v674, 80
        %v740 = vpop.permute.xlu0 %739
        %741 = vrot.lane.b32.xlu0 %v675, 80
        %v742 = vpop.permute.xlu0 %741
        %743 = vrot.lane.b32.xlu0 %v676, 80
        %v744 = vpop.permute.xlu0 %743
        %745 = vrot.lane.b32.xlu0 %v677, 80
        %v746 = vpop.permute.xlu0 %745
        %747 = vrot.lane.b32.xlu0 %v678, 80
        %v748 = vpop.permute.xlu0 %747
        %749 = vrot.lane.b32.xlu0 %v679, 80
        %v750 = vpop.permute.xlu0 %749
        %751 = vrot.lane.b32.xlu0 %v736, 80
        %v752 = vpop.permute.xlu0 %751
        %v753 = vunpack.c.l.b16 %v243
        %v754 = vunpack.c.l.b16 %v244
        %v755 = vpack.c.b16 %v754, %v753
        %756 = vrot.lane.b32.xlu0 %v610, 96
        %v757 = vpop.permute.xlu0 %756
        %758 = vrot.lane.b32.xlu0 %v611, 96
        %v759 = vpop.permute.xlu0 %758
        %760 = vrot.lane.b32.xlu0 %v612, 96
        %v761 = vpop.permute.xlu0 %760
        %762 = vrot.lane.b32.xlu0 %v613, 96
        %v763 = vpop.permute.xlu0 %762
        %764 = vrot.lane.b32.xlu0 %v614, 96
        %v765 = vpop.permute.xlu0 %764
        %766 = vrot.lane.b32.xlu0 %v615, 96
        %v767 = vpop.permute.xlu0 %766
        %768 = vrot.lane.b32.xlu0 %v698, 96
        %v769 = vpop.permute.xlu0 %768
        %770 = vrot.lane.b32.xlu0 %v755, 96
        %v771 = vpop.permute.xlu0 %770
        %v772 = vunpack.c.l.b16 %v571
        %v773 = vunpack.c.l.b16 %v581
        %v774 = vpack.c.b16 %v773, %v772
        %775 = vrot.lane.b32.xlu0 %v634, 112
        %v776 = vpop.permute.xlu0 %775
        %777 = vrot.lane.b32.xlu0 %v635, 112
        %v778 = vpop.permute.xlu0 %777
        %779 = vrot.lane.b32.xlu0 %v636, 112
        %v780 = vpop.permute.xlu0 %779
        %781 = vrot.lane.b32.xlu0 %v637, 112
        %v782 = vpop.permute.xlu0 %781
        %783 = vrot.lane.b32.xlu0 %v638, 112
        %v784 = vpop.permute.xlu0 %783
        %785 = vrot.lane.b32.xlu0 %v639, 112
        %v786 = vpop.permute.xlu0 %785
        %787 = vrot.lane.b32.xlu0 %v717, 112
        %v788 = vpop.permute.xlu0 %787
        %789 = vrot.lane.b32.xlu0 %v774, 112
        %v790 = vpop.permute.xlu0 %789
        %v791 = vunpack.c.l.b16 %v588
        %v792 = vunpack.c.l.b16 %v591
        %v793 = vpack.c.b16 %v792, %v791
        %vm794 = vcmask 130048
        %v797 = vsel %vm794, %v608, %v641
        %v800 = vsel %vm794, %v609, %v643
        %v803 = vsel %vm794, %v610, %v645
        %v806 = vsel %vm794, %v611, %v647
        %v809 = vsel %vm794, %v612, %v649
        %v812 = vsel %vm794, %v613, %v651
        %v815 = vsel %vm794, %v614, %v653
        %v818 = vsel %vm794, %v615, %v655
        %vm819 = vcmask 261120
        %v821 = vsel %vm819, %v797, %v681
        %v823 = vsel %vm819, %v800, %v683
        %v825 = vsel %vm819, %v803, %v685
        %v827 = vsel %vm819, %v806, %v687
        %v829 = vsel %vm819, %v809, %v689
        %v831 = vsel %vm819, %v812, %v691
        %v833 = vsel %vm819, %v815, %v693
        %v835 = vsel %vm819, %v818, %v695
        %vm836 = vcmask 392192
        %v838 = vsel %vm836, %v821, %v700
        %v840 = vsel %vm836, %v823, %v702
        %v842 = vsel %vm836, %v825, %v704
        %v844 = vsel %vm836, %v827, %v706
        %v846 = vsel %vm836, %v829, %v708
        %v848 = vsel %vm836, %v831, %v710
        %v850 = vsel %vm836, %v833, %v712
        %v852 = vsel %vm836, %v835, %v714
        %vm853 = vcmask 523264
        %v855 = vsel %vm853, %v838, %v719
        %v857 = vsel %vm853, %v840, %v721
        %v859 = vsel %vm853, %v842, %v723
        %v861 = vsel %vm853, %v844, %v725
        %v863 = vsel %vm853, %v846, %v727
        %v865 = vsel %vm853, %v848, %v729
        %v867 = vsel %vm853, %v850, %v731
        %v869 = vsel %vm853, %v852, %v733
        %vm870 = vcmask 654336
        %v872 = vsel %vm870, %v855, %v738
        %v874 = vsel %vm870, %v857, %v740
        %v876 = vsel %vm870, %v859, %v742
        %v878 = vsel %vm870, %v861, %v744
        %v880 = vsel %vm870, %v863, %v746
        %v882 = vsel %vm870, %v865, %v748
        %v884 = vsel %vm870, %v867, %v750
        %v886 = vsel %vm870, %v869, %v752
        %vm887 = vcmask 785408
        %v889 = vsel %vm887, %v872, %v757
        %v891 = vsel %vm887, %v874, %v759
        %v893 = vsel %vm887, %v876, %v761
        %v895 = vsel %vm887, %v878, %v763
        %v897 = vsel %vm887, %v880, %v765
        %v899 = vsel %vm887, %v882, %v767
        %v901 = vsel %vm887, %v884, %v769
        %v903 = vsel %vm887, %v886, %v771
        %vm904 = vcmask 916480
        %v906 = vsel %vm904, %v889, %v776
        %v909 = vsel %vm904, %v891, %v778
        %v912 = vsel %vm904, %v893, %v780
        %v915 = vsel %vm904, %v895, %v782
        %v918 = vsel %vm904, %v897, %v784
        %v921 = vsel %vm904, %v899, %v786
        %v924 = vsel %vm904, %v901, %v788
        %v927 = vsel %vm904, %v903, %v790
        %v929 = vld [vmem:[%s1] sm:$0xf]
        %v930 = vld [vmem:[%s1 + $0x4] sm:$0xf]
        %v931 = vld [vmem:[%s1 + $0x8] sm:$0xf]
        %v932 = vld [vmem:[%s1 + $0xc] sm:$0xf]
        %v933 = vld [vmem:[%s1 + $0x10] sm:$0xf]
        %v934 = vld [vmem:[%s1 + $0x14] sm:$0xf]
        %v935 = vld [vmem:[%s1 + $0x18] sm:$0xf]
        %v936 = vld [vmem:[%s1 + $0x1c] sm:$0xf]
        %v937 = vld [vmem:[%s1 + $0x20] sm:$0xf]
        %v938 = vld [vmem:[%s1 + $0x24] sm:$0xf]
        %v939 = vld [vmem:[%s1 + $0x28] sm:$0xf]
        %v940 = vld [vmem:[%s1 + $0x2c] sm:$0xf]
        %v941 = vld [vmem:[%s1 + $0x30] sm:$0xf]
        %v942 = vld [vmem:[%s1 + $0x34] sm:$0xf]
        %v943 = vld [vmem:[%s1 + $0x38] sm:$0xf]
        %v944 = vld [vmem:[%s1 + $0x3c] sm:$0xf]
        %v945 = vld [vmem:[%s1 + $0x40] sm:$0xf]
        %v946 = vld [vmem:[%s1 + $0x44] sm:$0xf]
        %v965 = vunpack.c.l.b16 %v929
        %v966 = vunpack.c.l.b16 %v930
        %v967 = vunpack.c.l.b16 %v931
        %v968 = vunpack.c.l.b16 %v932
        %v969 = vunpack.c.l.b16 %v933
        %v970 = vunpack.c.l.b16 %v934
        %v971 = vunpack.c.l.b16 %v935
        %v972 = vunpack.c.l.b16 %v936
        %v973 = vunpack.c.l.b16 %v937
        %v974 = vunpack.c.l.b16 %v938
        %v975 = vunpack.c.l.b16 %v939
        %v976 = vunpack.c.l.b16 %v940
        %v977 = vunpack.c.l.b16 %v941
        %v978 = vunpack.c.l.b16 %v942
        %v979 = vunpack.c.l.b16 %v943
        %v980 = vunpack.c.l.b16 %v944
        %v981 = vunpack.c.l.b16 %v945
        %v982 = vunpack.c.l.b16 %v946
        %v983 = vpack.c.b16 %v966, %v965
        %v984 = vpack.c.b16 %v968, %v967
        %v985 = vpack.c.b16 %v970, %v969
        %v986 = vpack.c.b16 %v972, %v971
        %v987 = vpack.c.b16 %v974, %v973
        %v988 = vpack.c.b16 %v976, %v975
        %v989 = vpack.c.b16 %v978, %v977
        %v990 = vpack.c.b16 %v980, %v979
        %v991 = vpack.c.b16 %v982, %v981
        %v1002 = vsel %vm794, %v674, 0
        %v1005 = vsel %vm794, %v675, 0
        %v1008 = vsel %vm794, %v676, 0
        %v1011 = vsel %vm794, %v677, 0
        %v1014 = vsel %vm794, %v678, 0
        %v1017 = vsel %vm794, %v679, 0
        %v1020 = vsel %vm794, %v736, 0
        %v1023 = vsel %vm794, %v793, 0
        %1025 = vmatpush.bf16.msra.mxu0 %v990
        %1026 = vmatpush.bf16.msra.mxu0 %v989
        %1027 = vmatpush.bf16.msra.mxu0 %v988
        %1028 = vmatpush.bf16.msra.mxu0 %v987
        %1029 = vmatpush.bf16.msra.mxu0 %v986
        %1030 = vmatpush.bf16.msra.mxu0 %v985
        %1031 = vmatpush.bf16.msra.mxu0 %v984
        %1032 = vmatpush.bf16.msra.mxu0 %v983
        %1033 = vmatmul.bf16.gmra.mxu0 %v906
        %v1034 = vpop.f32.mrf.mxu0
        %v1035 = vadd.f32 0.0, %v1034
        %v1036 = vpop.f32.mrf.mxu0
        %v1037 = vadd.f32 0.0, %v1036
        %1038 = vmatmul.bf16.gmra.mxu0 %v909
        %v1039 = vpop.f32.mrf.mxu0
        %v1040 = vadd.f32 0.0, %v1039
        %v1041 = vpop.f32.mrf.mxu0
        %v1042 = vadd.f32 0.0, %v1041
        %1043 = vmatmul.bf16.gmra.mxu0 %v912
        %v1044 = vpop.f32.mrf.mxu0
        %v1045 = vadd.f32 0.0, %v1044
        %v1046 = vpop.f32.mrf.mxu0
        %v1047 = vadd.f32 0.0, %v1046
        %1048 = vmatmul.bf16.gmra.mxu0 %v915
        %v1049 = vpop.f32.mrf.mxu0
        %v1050 = vadd.f32 0.0, %v1049
        %v1051 = vpop.f32.mrf.mxu0
        %v1052 = vadd.f32 0.0, %v1051
        %1053 = vmatmul.bf16.gmra.mxu0 %v918
        %v1054 = vpop.f32.mrf.mxu0
        %v1055 = vadd.f32 0.0, %v1054
        %v1056 = vpop.f32.mrf.mxu0
        %v1057 = vadd.f32 0.0, %v1056
        %1058 = vmatmul.bf16.gmra.mxu0 %v921
        %v1059 = vpop.f32.mrf.mxu0
        %v1060 = vadd.f32 0.0, %v1059
        %v1061 = vpop.f32.mrf.mxu0
        %v1062 = vadd.f32 0.0, %v1061
        %1063 = vmatmul.bf16.gmra.mxu0 %v924
        %v1064 = vpop.f32.mrf.mxu0
        %v1065 = vadd.f32 0.0, %v1064
        %v1066 = vpop.f32.mrf.mxu0
        %v1067 = vadd.f32 0.0, %v1066
        %1068 = vmatmul.bf16.gmra.mxu0 %v927
        %v1069 = vpop.f32.mrf.mxu0
        %v1070 = vadd.f32 0.0, %v1069
        %v1071 = vpop.f32.mrf.mxu0
        %v1072 = vadd.f32 0.0, %v1071
        %1073 = vdwg.mxu0
        %1074 = vmatpush.bf16.msra.mxu0 0
        %1075 = vmatpush.bf16.msra.mxu0 0
        %1076 = vmatpush.bf16.msra.mxu0 0
        %1077 = vmatpush.bf16.msra.mxu0 0
        %1078 = vmatpush.bf16.msra.mxu0 0
        %1079 = vmatpush.bf16.msra.mxu0 0
        %1080 = vmatpush.bf16.msra.mxu0 0
        %1081 = vmatpush.bf16.msra.mxu0 %v991
        %1082 = vmatmul.bf16.gmra.mxu0 %v1002
        %v1083 = vpop.f32.mrf.mxu0
        %v1084 = vadd.f32 %v1035, %v1083
        %v1085 = vpop.f32.mrf.mxu0
        %v1086 = vadd.f32 %v1037, %v1085
        %1087 = vmatmul.bf16.gmra.mxu0 %v1005
        %v1088 = vpop.f32.mrf.mxu0
        %v1089 = vadd.f32 %v1040, %v1088
        %v1090 = vpop.f32.mrf.mxu0
        %v1091 = vadd.f32 %v1042, %v1090
        %1092 = vmatmul.bf16.gmra.mxu0 %v1008
        %v1093 = vpop.f32.mrf.mxu0
        %v1094 = vadd.f32 %v1045, %v1093
        %v1095 = vpop.f32.mrf.mxu0
        %v1096 = vadd.f32 %v1047, %v1095
        %1097 = vmatmul.bf16.gmra.mxu0 %v1011
        %v1098 = vpop.f32.mrf.mxu0
        %v1099 = vadd.f32 %v1050, %v1098
        %v1100 = vpop.f32.mrf.mxu0
        %v1101 = vadd.f32 %v1052, %v1100
        %1102 = vmatmul.bf16.gmra.mxu0 %v1014
        %v1103 = vpop.f32.mrf.mxu0
        %v1104 = vadd.f32 %v1055, %v1103
        %v1105 = vpop.f32.mrf.mxu0
        %v1106 = vadd.f32 %v1057, %v1105
        %1107 = vmatmul.bf16.gmra.mxu0 %v1017
        %v1108 = vpop.f32.mrf.mxu0
        %v1109 = vadd.f32 %v1060, %v1108
        %v1110 = vpop.f32.mrf.mxu0
        %v1111 = vadd.f32 %v1062, %v1110
        %1112 = vmatmul.bf16.gmra.mxu0 %v1020
        %v1113 = vpop.f32.mrf.mxu0
        %v1114 = vadd.f32 %v1065, %v1113
        %v1115 = vpop.f32.mrf.mxu0
        %v1116 = vadd.f32 %v1067, %v1115
        %1117 = vmatmul.bf16.gmra.mxu0 %v1023
        %v1118 = vpop.f32.mrf.mxu0
        %v1119 = vadd.f32 %v1070, %v1118
        %v1120 = vpop.f32.mrf.mxu0
        %v1121 = vadd.f32 %v1072, %v1120
        %1122 = vdwg.mxu0
        %v1123 = vld [vmem:[%s2] sm:$0x1]
        %v1125 = vperm.slane %v1123, 0
        %v1127 = vmul.f32 %v1084, %v1125
        %v1128 = vmul.f32 %v1086, %v1125
        %v1129 = vmul.f32 %v1089, %v1125
        %v1130 = vmul.f32 %v1091, %v1125
        %v1131 = vmul.f32 %v1094, %v1125
        %v1132 = vmul.f32 %v1096, %v1125
        %v1133 = vmul.f32 %v1099, %v1125
        %v1134 = vmul.f32 %v1101, %v1125
        %v1135 = vmul.f32 %v1104, %v1125
        %v1136 = vmul.f32 %v1106, %v1125
        %v1137 = vmul.f32 %v1109, %v1125
        %v1138 = vmul.f32 %v1111, %v1125
        %v1139 = vmul.f32 %v1114, %v1125
        %v1140 = vmul.f32 %v1116, %v1125
        %v1141 = vmul.f32 %v1119, %v1125
        %v1142 = vmul.f32 %v1121, %v1125
        %v1143 = vld [vmem:[%s3] sm:$0x1]
        %v1145 = vperm.slane %v1143, 0
        %v1147 = vadd.f32 %v1127, %v1145
        %v1148 = vadd.f32 %v1128, %v1145
        %v1149 = vadd.f32 %v1129, %v1145
        %v1150 = vadd.f32 %v1130, %v1145
        %v1151 = vadd.f32 %v1131, %v1145
        %v1152 = vadd.f32 %v1132, %v1145
        %v1153 = vadd.f32 %v1133, %v1145
        %v1154 = vadd.f32 %v1134, %v1145
        %v1155 = vadd.f32 %v1135, %v1145
        %v1156 = vadd.f32 %v1136, %v1145
        %v1157 = vadd.f32 %v1137, %v1145
        %v1158 = vadd.f32 %v1138, %v1145
        %v1159 = vadd.f32 %v1139, %v1145
        %v1160 = vadd.f32 %v1140, %v1145
        %v1161 = vadd.f32 %v1141, %v1145
        %v1162 = vadd.f32 %v1142, %v1145
        %v1163 = vmax.f32 %v1147, 0.0
        %v1164 = vmax.f32 %v1148, 0.0
        %v1165 = vmax.f32 %v1149, 0.0
        %v1166 = vmax.f32 %v1150, 0.0
        %v1167 = vmax.f32 %v1151, 0.0
        %v1168 = vmax.f32 %v1152, 0.0
        %v1169 = vmax.f32 %v1153, 0.0
        %v1170 = vmax.f32 %v1154, 0.0
        %v1171 = vmax.f32 %v1155, 0.0
        %v1172 = vmax.f32 %v1156, 0.0
        %v1173 = vmax.f32 %v1157, 0.0
        %v1174 = vmax.f32 %v1158, 0.0
        %v1175 = vmax.f32 %v1159, 0.0
        %v1176 = vmax.f32 %v1160, 0.0
        %v1177 = vmax.f32 %v1161, 0.0
        %v1178 = vmax.f32 %v1162, 0.0
        %v1179 = vpack.c.bf16 %v1163, %v1163
        %v1180 = vpack.c.bf16 %v1164, %v1164
        %v1181 = vpack.c.bf16 %v1165, %v1165
        %v1182 = vpack.c.bf16 %v1166, %v1166
        %v1183 = vpack.c.bf16 %v1167, %v1167
        %v1184 = vpack.c.bf16 %v1168, %v1168
        %v1185 = vpack.c.bf16 %v1169, %v1169
        %v1186 = vpack.c.bf16 %v1170, %v1170
        %v1187 = vpack.c.bf16 %v1171, %v1171
        %v1188 = vpack.c.bf16 %v1172, %v1172
        %v1189 = vpack.c.bf16 %v1173, %v1173
        %v1190 = vpack.c.bf16 %v1174, %v1174
        %v1191 = vpack.c.bf16 %v1175, %v1175
        %v1192 = vpack.c.bf16 %v1176, %v1176
        %v1193 = vpack.c.bf16 %v1177, %v1177
        %v1194 = vpack.c.bf16 %v1178, %v1178
        %vm1195 = vcmask 125952
        %1196 = vst.msk [vmem:[%s204] sm:$0xf] %vm1195, %v1179
        %1197 = vst.msk [vmem:[%s204 + $0x4] sm:$0xf] %vm1195, %v1180
        %1198 = vst.msk [vmem:[%s204 + $0x8] sm:$0xf] %vm1195, %v1181
        %1199 = vst.msk [vmem:[%s204 + $0xc] sm:$0xf] %vm1195, %v1182
        %1200 = vst.msk [vmem:[%s204 + $0x10] sm:$0xf] %vm1195, %v1183
        %1201 = vst.msk [vmem:[%s204 + $0x14] sm:$0xf] %vm1195, %v1184
        %1202 = vst.msk [vmem:[%s204 + $0x18] sm:$0xf] %vm1195, %v1185
        %1203 = vst.msk [vmem:[%s204 + $0x1c] sm:$0xf] %vm1195, %v1186
        %1204 = vst.msk [vmem:[%s204 + $0x20] sm:$0xf] %vm1195, %v1187
        %1205 = vst.msk [vmem:[%s204 + $0x24] sm:$0xf] %vm1195, %v1188
        %1206 = vst.msk [vmem:[%s204 + $0x28] sm:$0xf] %vm1195, %v1189
        %1207 = vst.msk [vmem:[%s204 + $0x2c] sm:$0xf] %vm1195, %v1190
        %1208 = vst.msk [vmem:[%s204 + $0x30] sm:$0xf] %vm1195, %v1191
        %1209 = vst.msk [vmem:[%s204 + $0x34] sm:$0xf] %vm1195, %v1192
        %1210 = vst.msk [vmem:[%s204 + $0x38] sm:$0xf] %vm1195, %v1193
        %1211 = vst.msk [vmem:[%s204 + $0x3c] sm:$0xf] %vm1195, %v1194
        %s1212 = sand.u32 %s129, 1
        %s1213 = scalar_lea.sflag [#allocation3], %s1212
        %s1214 = sand.u32 %s129, 1
        %s1215 = smul.addr %s1214, 64
        %s1216 = scalar_lea.vmem [#allocation2], %s1215
        // Predicated region
        $region37: #{tpu_custom_call.1} parent=35 // pred_check
          %p1217 = pneg %p139
        $region38: #{tpu_custom_call.1} parent=35 // pred_check_branch
          %1219 = sbr.rel (%p1217) target = $region40
        $region39: #{tpu_custom_call.1} parent=35 // pred_region
          %s1220 = smul.u32 8, %s23
          %1222 = vsyncadd %s1213, 0
          %s1223 = smul.addr %s1220, 2
          %s1224 = smul.addr %s22, 32
          %s1225 = sadd.s32 %s1223, %s1224
          %s1226 = smul.addr %s1225, 4
          %s1227 = scalar_lea.hbm %s4, %s1226
          %s1228 = sshll.u32 %s1216, 4
          %s1229 = int_to_ptr.vmem [resolvable:$true] %s1228
          %s1230 = sshll.u32 %s1227, 4
          %s1231 = int_to_ptr.hbm [resolvable:$true] %s1230
          %1236 = dma.vmem_to_hbm [thread:$0]  %s1229, 1024, %s1231, %s1213, 64, 64, 4
        $region40: #{tpu_custom_call.1} parent=35 // pred_fallthru
          _
      $region36: #{tpu_custom_call.1} parent=5 // pred_fallthru
        _
      %p1237 = scmp.le.s32.totalorder 2, %s13
      // Predicated region
      $region41: #{tpu_custom_call.1} parent=5 // pred_check
        %p1238 = pneg %p1237
      $region42: #{tpu_custom_call.1} parent=5 // pred_check_branch
        %1240 = sbr.rel (%p1238) target = $region44
      $region43: #{tpu_custom_call.1} parent=5 // pred_region
        %s1241 = ssub.s32 %s13, 2
        // Predicated region
        $region45: #{tpu_custom_call.1} parent=43 // pred_check
          %p1242 = pneg %p145
        $region46: #{tpu_custom_call.1} parent=43 // pred_check_branch
          %1244 = sbr.rel (%p1242) target = $region48
        $region47: #{tpu_custom_call.1} parent=43 // pred_region
          %s1245 = sand.u32 %s130, 1
          %s1246 = scalar_lea.sflag [#allocation3], %s1245
          %s1247 = sand.u32 %s130, 1
          %s1248 = smul.addr %s1247, 64
          %s1249 = scalar_lea.vmem [#allocation2], %s1248
          %1251 = dma.done %s1246, 1024
        $region48: #{tpu_custom_call.1} parent=43 // pred_fallthru
          _
      $region44: #{tpu_custom_call.1} parent=5 // pred_fallthru
        _
    $region6: #{tpu_custom_call.1} parent=1 // loop_footer
      %s17 = sadd.s32 1, %s13
    $region7: #{tpu_custom_call.1} parent=1 // loop_footer_branch
      %12 = sbr.rel target = $region3
    $region8: #{tpu_custom_call.1} parent=1 // loop_exit
      _
    %1252 = vsyncpa [#allocation3], 1
    %s1253 = scalar_lea.sflag [#allocation3], 1
    %1254 = vsyncpa %s1253, 1

</llo_original>
